<compile_context>
chip_gen: v7x
topology: tpu7x:2x2x1
jax: 0.10.0
libtpu: 0.0.40
codegen_flags: <defaults>
</compile_context>

<pallas_src>
import functools

import jax
import jax.numpy as jnp
from jax.experimental import pallas as pl
from jax.experimental.pallas import tpu as pltpu


# ------------------------------ fused kernel ------------------------------- #

def _bn_relu(v, g, b, eps):
    # BatchNorm1d training-mode semantics: per-channel batch mean and *biased*
    # variance over the node (batch) dimension, affine, then ReLU.
    # One-pass stats: var = E[x^2] - mean^2 (halves XLU reductions).
    mean = jnp.mean(v, axis=0, keepdims=True)
    ex2 = jnp.mean(v * v, axis=0, keepdims=True)
    var = ex2 - mean * mean
    return jnp.maximum((v - mean) * jax.lax.rsqrt(var + eps) * g + b, 0.0)


def _gcn_fused_kernel(
    a_ref,        # VMEM [N, N]   normalized adjacency D^-1/2 (A+I) D^-1/2
    x_ref,        # VMEM [N, Cin] node features
    w1_ref,       # VMEM [Cin, H] conv1 weight
    w2_ref,       # VMEM [H, C]   conv2 weight
    e_ref,        # VMEM [N, 1]   edge scalar feature
    d_ref,        # VMEM [N, C]   emb[degree] gathered in wrapper
    wfc2_ref,     # VMEM [3C, C]  fc_2 weight (whole)
    pv_ref,       # VMEM [11, W]  packed tiny per-channel vectors
    o_ref,        # VMEM [N, C]   output
    *, eps, hid, c,
):
    # --- unpack tiny parameter rows (static slices: zero runtime cost) ------
    b1   = pv_ref[0:1, 0:hid]
    b2   = pv_ref[1:2, 0:c]
    bn_g = pv_ref[2:3, 0:c]
    bn_b = pv_ref[3:4, 0:c]
    w0   = pv_ref[4:5, 0:c]
    b0   = pv_ref[5:6, 0:c]
    be_g = pv_ref[6:7, 0:c]
    be_b = pv_ref[7:8, 0:c]
    bd_g = pv_ref[8:9, 0:c]
    bd_b = pv_ref[9:10, 0:c]
    bfc2 = pv_ref[10:11, 0:c]

    a = a_ref[...]

    # --- conv1 -> relu  (X@W first: C << N, keep this contraction order) ----
    xw = jnp.dot(x_ref[...], w1_ref[...], preferred_element_type=jnp.float32)
    h = jnp.dot(a, xw, preferred_element_type=jnp.float32) + b1
    h = jnp.maximum(h, 0.0)
    # TODO(synk): F.dropout(x, 0.2) is stochastic (training=True default); treated as identity.

    # --- conv2 -> bn -> relu -------------------------------------------------
    hw = jnp.dot(h, w2_ref[...], preferred_element_type=jnp.float32)
    h2 = jnp.dot(a, hw, preferred_element_type=jnp.float32) + b2
    h2 = _bn_relu(h2, bn_g, bn_b, eps)

    # --- fc_0(edges) -> be -> relu  (K=1 linear == broadcast mul on VPU) ----
    e = e_ref[...] * w0 + b0
    e = _bn_relu(e, be_g, be_b, eps)

    # --- fc_1 (embedding gathered in wrapper) -> bd -> relu ------------------
    d = _bn_relu(d_ref[...], bd_g, bd_b, eps)

    # --- concat + fc_2: one (N, 3C) @ (3C, C) matmul -------------------------
    cat = jnp.concatenate([h2, e, d], axis=1)
    o_ref[...] = jnp.dot(cat, wfc2_ref[...],
                         preferred_element_type=jnp.float32) + bfc2


# ------------------------------- glue (JAX) -------------------------------- #

def build_norm_adj(edge_index, edge_weight, n):
    """Dense GCNConv propagation matrix: D^-1/2 (A + I) D^-1/2.

    A_hat[target, source] = normalized edge weight (messages flow src -> dst).
    """
    src, dst = edge_index[0], edge_index[1]
    a = jnp.zeros((n, n), jnp.float32).at[dst, src].add(edge_weight)
    a = a + jnp.eye(n, dtype=jnp.float32)          # self-loops, weight 1
    deg = a.sum(axis=1)
    dinv = jnp.where(deg > 0, 1.0 / jnp.sqrt(deg), 0.0)
    return dinv[:, None] * a * dinv[None, :]


def gcn_forward(params, x, edge_index, edge_weight, edges, degree, eps=1e-5):
    n, c_in = x.shape
    hid = params["w1"].shape[1]
    c_out = params["w2"].shape[1]
    num_emb = params["emb"].shape[0]

    a_hat = build_norm_adj(edge_index, edge_weight, n)

    # Embedding gather in the wrapper (tiny [N, C] array into VMEM, not the
    # whole [500, C] table).  Clamp: PyTorch would raise on OOB indices.
    deg_idx = jnp.clip(degree.astype(jnp.int32), 0, num_emb - 1)
    d_in = params["emb"][deg_idx]

    # Pack all tiny per-channel vectors into a single [11, W] array.
    w_pad = max(hid, c_out)

    def padrow(v):
        v = v.astype(jnp.float32).reshape(-1)
        return jnp.pad(v, (0, w_pad - v.shape[0]))

    packed = jnp.stack([
        padrow(params["b1"]), padrow(params["b2"]),
        padrow(params["bn_g"]), padrow(params["bn_b"]),
        padrow(params["w0"]), padrow(params["b0"]),
        padrow(params["be_g"]), padrow(params["be_b"]),
        padrow(params["bd_g"]), padrow(params["bd_b"]),
        padrow(params["b_fc2"]),
    ])

    vmem = pl.BlockSpec(memory_space=pltpu.MemorySpace.VMEM)

    args = (
        a_hat,
        x.astype(jnp.float32),
        params["w1"].astype(jnp.float32),
        params["w2"].astype(jnp.float32),
        edges.astype(jnp.float32),
        d_in.astype(jnp.float32),
        params["w_fc2"].astype(jnp.float32),
        packed,
    )

    flops = 2 * n * (c_in * hid + n * hid + hid * c_out + n * c_out
                     + 3 * c_out * c_out)
    bytes_accessed = 4 * (n * n + n * c_in + c_in * hid + hid * c_out
                          + n + n * c_out + 3 * c_out * c_out
                          + 11 * w_pad + n * c_out)

    return pl.pallas_call(
        functools.partial(_gcn_fused_kernel, eps=eps, hid=hid, c=c_out),
        out_shape=jax.ShapeDtypeStruct((n, c_out), jnp.float32),
        in_specs=[vmem] * len(args),
        out_specs=vmem,
        cost_estimate=pl.CostEstimate(flops=flops, transcendentals=0,
                                      bytes_accessed=bytes_accessed),
    )(*args)


def gcn_forward_ref(params, x, edge_index, edge_weight, edges, degree, eps=1e-5):
    """Plain-JAX reference (same math) used for a correctness sanity check."""
    n = x.shape[0]
    num_emb = params["emb"].shape[0]
    a_hat = build_norm_adj(edge_index, edge_weight, n)

    def bn_relu(v, g, b):
        mean = jnp.mean(v, axis=0, keepdims=True)
        var = jnp.mean((v - mean) ** 2, axis=0, keepdims=True)
        return jnp.maximum((v - mean) * jax.lax.rsqrt(var + eps) * g + b, 0.0)

    h = jnp.maximum(a_hat @ (x @ params["w1"]) + params["b1"], 0.0)
    h2 = a_hat @ (h @ params["w2"]) + params["b2"]
    h2 = bn_relu(h2, params["bn_g"], params["bn_b"])
    e = bn_relu(edges @ params["w0"] + params["b0"], params["be_g"], params["be_b"])
    d_idx = jnp.clip(degree.astype(jnp.int32), 0, num_emb - 1)
    d = bn_relu(params["emb"][d_idx], params["bd_g"], params["bd_b"])
    cat = jnp.concatenate([h2, e, d], axis=1)
    return cat @ params["w_fc2"] + params["b_fc2"]


def init_params(key, in_channels, hidden_channels, out_channels, num_emb=500):
    ks = jax.random.split(key, 8)

    def glorot(k, shape):
        limit = jnp.sqrt(6.0 / (shape[0] + shape[1]))
        return jax.random.uniform(k, shape, jnp.float32, -limit, limit)

    c_out = out_channels
    return {
        # GCNConv layers (weights stored [in, out])
        "w1": glorot(ks[0], (in_channels, hidden_channels)),
        "b1": jnp.zeros((hidden_channels,), jnp.float32),
        "w2": glorot(ks[1], (hidden_channels, c_out)),
        "b2": jnp.zeros((c_out,), jnp.float32),
        # fc_0: Linear(1, out_channels)
        "w0": glorot(ks[2], (1, c_out)),
        "b0": jnp.zeros((c_out,), jnp.float32),
        # fc_1: Embedding(500, out_channels)
        "emb": jax.random.normal(ks[3], (num_emb, c_out), jnp.float32),
        # fc_2: Linear(3*out, out)
        "w_fc2": glorot(ks[4], (3 * c_out, c_out)),
        "b_fc2": jnp.zeros((c_out,), jnp.float32),
        # BatchNorm affine params (be, bn, bd)
        "be_g": jnp.ones((c_out,), jnp.float32), "be_b": jnp.zeros((c_out,), jnp.float32),
        "bn_g": jnp.ones((c_out,), jnp.float32), "bn_b": jnp.zeros((c_out,), jnp.float32),
        "bd_g": jnp.ones((c_out,), jnp.float32), "bd_b": jnp.zeros((c_out,), jnp.float32),
    }


if __name__ == "__main__":
    key = jax.random.PRNGKey(0)
    N, C_IN, C_HID, C_OUT, E = 16, 8, 16, 8, 40

    ks = jax.random.split(key, 8)
    x = jax.random.normal(ks[0], (N, C_IN), jnp.float32)
    src = jax.random.randint(ks[1], (E,), 0, N, dtype=jnp.int32)
    dst = jax.random.randint(ks[2], (E,), 0, N, dtype=jnp.int32)
    edge_index = jnp.stack([src, dst], axis=0)              # [2, E]
    edge_weight = jax.random.uniform(ks[3], (E,), jnp.float32)
    edges = jax.random.normal(ks[4], (N, 1), jnp.float32)   # Linear(1, C_OUT) input
    degree = jax.random.randint(ks[5], (N,), 0, 500, dtype=jnp.int32)  # Embedding indices

    params = init_params(ks[6], C_IN, C_HID, C_OUT)

    out = gcn_forward(params, x, edge_index, edge_weight, edges, degree)
    out = jax.block_until_ready(out)

    ref = jax.block_until_ready(
        gcn_forward_ref(params, x, edge_index, edge_weight, edges, degree))

    assert out.shape == (N, C_OUT) and out.dtype == jnp.float32
    assert bool(jnp.all(jnp.isfinite(out)))
    assert bool(jnp.allclose(out, ref, rtol=1e-2, atol=1e-2))
    print("KERNEL_OK")
</pallas_src>

<mosaic_0001>
module attributes {stable_mosaic.version = 11 : i64} {
  func.func @_gcn_fused_kernel(%arg0: memref<16x16xf32, #tpu.memory_space<vmem>>, %arg1: memref<16x8xf32, #tpu.memory_space<vmem>>, %arg2: memref<8x16xf32, #tpu.memory_space<vmem>>, %arg3: memref<16x8xf32, #tpu.memory_space<vmem>>, %arg4: memref<16x1xf32, #tpu.memory_space<vmem>>, %arg5: memref<16x8xf32, #tpu.memory_space<vmem>>, %arg6: memref<24x8xf32, #tpu.memory_space<vmem>>, %arg7: memref<11x16xf32, #tpu.memory_space<vmem>>, %arg8: memref<16x8xf32, #tpu.memory_space<vmem>>) attributes {dimension_semantics = [], scalar_prefetch = 0 : i64, scratch_operands = 0 : i64, tpu.core_type = #tpu.core_type<tc>} {
    %c0 = arith.constant 0 : index
    %c0_0 = arith.constant 0 : index
    %0 = vector.load %arg7[%c0, %c0_0] : memref<11x16xf32, #tpu.memory_space<vmem>>, vector<1x16xf32>
    %c1 = arith.constant 1 : index
    %c0_1 = arith.constant 0 : index
    %1 = vector.load %arg7[%c1, %c0_1] : memref<11x16xf32, #tpu.memory_space<vmem>>, vector<1x8xf32>
    %c2 = arith.constant 2 : index
    %c0_2 = arith.constant 0 : index
    %2 = vector.load %arg7[%c2, %c0_2] : memref<11x16xf32, #tpu.memory_space<vmem>>, vector<1x8xf32>
    %c3 = arith.constant 3 : index
    %c0_3 = arith.constant 0 : index
    %3 = vector.load %arg7[%c3, %c0_3] : memref<11x16xf32, #tpu.memory_space<vmem>>, vector<1x8xf32>
    %c4 = arith.constant 4 : index
    %c0_4 = arith.constant 0 : index
    %4 = vector.load %arg7[%c4, %c0_4] : memref<11x16xf32, #tpu.memory_space<vmem>>, vector<1x8xf32>
    %c5 = arith.constant 5 : index
    %c0_5 = arith.constant 0 : index
    %5 = vector.load %arg7[%c5, %c0_5] : memref<11x16xf32, #tpu.memory_space<vmem>>, vector<1x8xf32>
    %c6 = arith.constant 6 : index
    %c0_6 = arith.constant 0 : index
    %6 = vector.load %arg7[%c6, %c0_6] : memref<11x16xf32, #tpu.memory_space<vmem>>, vector<1x8xf32>
    %c7 = arith.constant 7 : index
    %c0_7 = arith.constant 0 : index
    %7 = vector.load %arg7[%c7, %c0_7] : memref<11x16xf32, #tpu.memory_space<vmem>>, vector<1x8xf32>
    %c8 = arith.constant 8 : index
    %c0_8 = arith.constant 0 : index
    %8 = vector.load %arg7[%c8, %c0_8] : memref<11x16xf32, #tpu.memory_space<vmem>>, vector<1x8xf32>
    %c9 = arith.constant 9 : index
    %c0_9 = arith.constant 0 : index
    %9 = vector.load %arg7[%c9, %c0_9] : memref<11x16xf32, #tpu.memory_space<vmem>>, vector<1x8xf32>
    %c10 = arith.constant 10 : index
    %c0_10 = arith.constant 0 : index
    %10 = vector.load %arg7[%c10, %c0_10] : memref<11x16xf32, #tpu.memory_space<vmem>>, vector<1x8xf32>
    %c0_11 = arith.constant 0 : index
    %c0_12 = arith.constant 0 : index
    %11 = vector.load %arg0[%c0_11, %c0_12] : memref<16x16xf32, #tpu.memory_space<vmem>>, vector<16x16xf32>
    %c0_13 = arith.constant 0 : index
    %c0_14 = arith.constant 0 : index
    %12 = vector.load %arg1[%c0_13, %c0_14] : memref<16x8xf32, #tpu.memory_space<vmem>>, vector<16x8xf32>
    %c0_15 = arith.constant 0 : index
    %c0_16 = arith.constant 0 : index
    %13 = vector.load %arg2[%c0_15, %c0_16] : memref<8x16xf32, #tpu.memory_space<vmem>>, vector<8x16xf32>
    %cst = arith.constant dense<0.000000e+00> : vector<16x16xf32>
    %14 = tpu.matmul %12, %13, %cst {dimension_numbers = #tpu.dot_dimension_numbers<[1], [0], [0], [1], [0, 0, 1, 1], [], []>} : vector<16x8xf32>, vector<8x16xf32>, vector<16x16xf32> -> vector<16x16xf32>
    %cst_17 = arith.constant dense<0.000000e+00> : vector<16x16xf32>
    %15 = tpu.matmul %11, %14, %cst_17 {dimension_numbers = #tpu.dot_dimension_numbers<[1], [0], [0], [1], [0, 0, 1, 1], [], []>} : vector<16x16xf32>, vector<16x16xf32>, vector<16x16xf32> -> vector<16x16xf32>
    %16 = vector.broadcast %0 : vector<1x16xf32> to vector<16x16xf32>
    %17 = arith.addf %15, %16 : vector<16x16xf32>
    %cst_18 = arith.constant 0.000000e+00 : f32
    %18 = vector.broadcast %cst_18 : f32 to vector<16x16xf32>
    %19 = arith.maximumf %17, %18 : vector<16x16xf32>
    %c0_19 = arith.constant 0 : index
    %c0_20 = arith.constant 0 : index
    %20 = vector.load %arg3[%c0_19, %c0_20] : memref<16x8xf32, #tpu.memory_space<vmem>>, vector<16x8xf32>
    %cst_21 = arith.constant dense<0.000000e+00> : vector<16x8xf32>
    %21 = tpu.matmul %19, %20, %cst_21 {dimension_numbers = #tpu.dot_dimension_numbers<[1], [0], [0], [1], [0, 0, 1, 1], [], []>} : vector<16x16xf32>, vector<16x8xf32>, vector<16x8xf32> -> vector<16x8xf32>
    %cst_22 = arith.constant dense<0.000000e+00> : vector<16x8xf32>
    %22 = tpu.matmul %11, %21, %cst_22 {dimension_numbers = #tpu.dot_dimension_numbers<[1], [0], [0], [1], [0, 0, 1, 1], [], []>} : vector<16x16xf32>, vector<16x8xf32>, vector<16x8xf32> -> vector<16x8xf32>
    %23 = vector.broadcast %1 : vector<1x8xf32> to vector<16x8xf32>
    %24 = arith.addf %22, %23 : vector<16x8xf32>
    %cst_23 = arith.constant dense<0.000000e+00> : vector<8xf32>
    %25 = vector.multi_reduction <add>, %24, %cst_23 [0] : vector<16x8xf32> to vector<8xf32>
    %26 = vector.shape_cast %25 : vector<8xf32> to vector<1x8xf32>
    %cst_24 = arith.constant 1.600000e+01 : f32
    %27 = vector.broadcast %cst_24 : f32 to vector<1x8xf32>
    %28 = arith.divf %26, %27 : vector<1x8xf32>
    %29 = arith.mulf %24, %24 : vector<16x8xf32>
    %cst_25 = arith.constant dense<0.000000e+00> : vector<8xf32>
    %30 = vector.multi_reduction <add>, %29, %cst_25 [0] : vector<16x8xf32> to vector<8xf32>
    %31 = vector.shape_cast %30 : vector<8xf32> to vector<1x8xf32>
    %cst_26 = arith.constant 1.600000e+01 : f32
    %32 = vector.broadcast %cst_26 : f32 to vector<1x8xf32>
    %33 = arith.divf %31, %32 : vector<1x8xf32>
    %34 = arith.mulf %28, %28 : vector<1x8xf32>
    %35 = arith.subf %33, %34 : vector<1x8xf32>
    %36 = vector.broadcast %28 : vector<1x8xf32> to vector<16x8xf32>
    %37 = arith.subf %24, %36 : vector<16x8xf32>
    %cst_27 = arith.constant 9.99999974E-6 : f32
    %38 = vector.broadcast %cst_27 : f32 to vector<1x8xf32>
    %39 = arith.addf %35, %38 : vector<1x8xf32>
    %40 = math.rsqrt %39 : vector<1x8xf32>
    %41 = vector.broadcast %40 : vector<1x8xf32> to vector<16x8xf32>
    %42 = arith.mulf %37, %41 : vector<16x8xf32>
    %43 = vector.broadcast %2 : vector<1x8xf32> to vector<16x8xf32>
    %44 = arith.mulf %42, %43 : vector<16x8xf32>
    %45 = vector.broadcast %3 : vector<1x8xf32> to vector<16x8xf32>
    %46 = arith.addf %44, %45 : vector<16x8xf32>
    %cst_28 = arith.constant 0.000000e+00 : f32
    %47 = vector.broadcast %cst_28 : f32 to vector<16x8xf32>
    %48 = arith.maximumf %46, %47 : vector<16x8xf32>
    %c0_29 = arith.constant 0 : index
    %c0_30 = arith.constant 0 : index
    %49 = vector.load %arg4[%c0_29, %c0_30] : memref<16x1xf32, #tpu.memory_space<vmem>>, vector<16x1xf32>
    %50 = vector.broadcast %49 : vector<16x1xf32> to vector<16x8xf32>
    %51 = vector.broadcast %4 : vector<1x8xf32> to vector<16x8xf32>
    %52 = arith.mulf %50, %51 : vector<16x8xf32>
    %53 = vector.broadcast %5 : vector<1x8xf32> to vector<16x8xf32>
    %54 = arith.addf %52, %53 : vector<16x8xf32>
    %cst_31 = arith.constant dense<0.000000e+00> : vector<8xf32>
    %55 = vector.multi_reduction <add>, %54, %cst_31 [0] : vector<16x8xf32> to vector<8xf32>
    %56 = vector.shape_cast %55 : vector<8xf32> to vector<1x8xf32>
    %cst_32 = arith.constant 1.600000e+01 : f32
    %57 = vector.broadcast %cst_32 : f32 to vector<1x8xf32>
    %58 = arith.divf %56, %57 : vector<1x8xf32>
    %59 = arith.mulf %54, %54 : vector<16x8xf32>
    %cst_33 = arith.constant dense<0.000000e+00> : vector<8xf32>
    %60 = vector.multi_reduction <add>, %59, %cst_33 [0] : vector<16x8xf32> to vector<8xf32>
    %61 = vector.shape_cast %60 : vector<8xf32> to vector<1x8xf32>
    %cst_34 = arith.constant 1.600000e+01 : f32
    %62 = vector.broadcast %cst_34 : f32 to vector<1x8xf32>
    %63 = arith.divf %61, %62 : vector<1x8xf32>
    %64 = arith.mulf %58, %58 : vector<1x8xf32>
    %65 = arith.subf %63, %64 : vector<1x8xf32>
    %66 = vector.broadcast %58 : vector<1x8xf32> to vector<16x8xf32>
    %67 = arith.subf %54, %66 : vector<16x8xf32>
    %cst_35 = arith.constant 9.99999974E-6 : f32
    %68 = vector.broadcast %cst_35 : f32 to vector<1x8xf32>
    %69 = arith.addf %65, %68 : vector<1x8xf32>
    %70 = math.rsqrt %69 : vector<1x8xf32>
    %71 = vector.broadcast %70 : vector<1x8xf32> to vector<16x8xf32>
    %72 = arith.mulf %67, %71 : vector<16x8xf32>
    %73 = vector.broadcast %6 : vector<1x8xf32> to vector<16x8xf32>
    %74 = arith.mulf %72, %73 : vector<16x8xf32>
    %75 = vector.broadcast %7 : vector<1x8xf32> to vector<16x8xf32>
    %76 = arith.addf %74, %75 : vector<16x8xf32>
    %cst_36 = arith.constant 0.000000e+00 : f32
    %77 = vector.broadcast %cst_36 : f32 to vector<16x8xf32>
    %78 = arith.maximumf %76, %77 : vector<16x8xf32>
    %c0_37 = arith.constant 0 : index
    %c0_38 = arith.constant 0 : index
    %79 = vector.load %arg5[%c0_37, %c0_38] : memref<16x8xf32, #tpu.memory_space<vmem>>, vector<16x8xf32>
    %cst_39 = arith.constant dense<0.000000e+00> : vector<8xf32>
    %80 = vector.multi_reduction <add>, %79, %cst_39 [0] : vector<16x8xf32> to vector<8xf32>
    %81 = vector.shape_cast %80 : vector<8xf32> to vector<1x8xf32>
    %cst_40 = arith.constant 1.600000e+01 : f32
    %82 = vector.broadcast %cst_40 : f32 to vector<1x8xf32>
    %83 = arith.divf %81, %82 : vector<1x8xf32>
    %84 = arith.mulf %79, %79 : vector<16x8xf32>
    %cst_41 = arith.constant dense<0.000000e+00> : vector<8xf32>
    %85 = vector.multi_reduction <add>, %84, %cst_41 [0] : vector<16x8xf32> to vector<8xf32>
    %86 = vector.shape_cast %85 : vector<8xf32> to vector<1x8xf32>
    %cst_42 = arith.constant 1.600000e+01 : f32
    %87 = vector.broadcast %cst_42 : f32 to vector<1x8xf32>
    %88 = arith.divf %86, %87 : vector<1x8xf32>
    %89 = arith.mulf %83, %83 : vector<1x8xf32>
    %90 = arith.subf %88, %89 : vector<1x8xf32>
    %91 = vector.broadcast %83 : vector<1x8xf32> to vector<16x8xf32>
    %92 = arith.subf %79, %91 : vector<16x8xf32>
    %cst_43 = arith.constant 9.99999974E-6 : f32
    %93 = vector.broadcast %cst_43 : f32 to vector<1x8xf32>
    %94 = arith.addf %90, %93 : vector<1x8xf32>
    %95 = math.rsqrt %94 : vector<1x8xf32>
    %96 = vector.broadcast %95 : vector<1x8xf32> to vector<16x8xf32>
    %97 = arith.mulf %92, %96 : vector<16x8xf32>
    %98 = vector.broadcast %8 : vector<1x8xf32> to vector<16x8xf32>
    %99 = arith.mulf %97, %98 : vector<16x8xf32>
    %100 = vector.broadcast %9 : vector<1x8xf32> to vector<16x8xf32>
    %101 = arith.addf %99, %100 : vector<16x8xf32>
    %cst_44 = arith.constant 0.000000e+00 : f32
    %102 = vector.broadcast %cst_44 : f32 to vector<16x8xf32>
    %103 = arith.maximumf %101, %102 : vector<16x8xf32>
    %104 = tpu.concatenate %48, %78, %103 in 1 : vector<16x8xf32>, vector<16x8xf32>, vector<16x8xf32> -> vector<16x24xf32>
    %c0_45 = arith.constant 0 : index
    %c0_46 = arith.constant 0 : index
    %105 = vector.load %arg6[%c0_45, %c0_46] : memref<24x8xf32, #tpu.memory_space<vmem>>, vector<24x8xf32>
    %cst_47 = arith.constant dense<0.000000e+00> : vector<16x8xf32>
    %106 = tpu.matmul %104, %105, %cst_47 {dimension_numbers = #tpu.dot_dimension_numbers<[1], [0], [0], [1], [0, 0, 1, 1], [], []>} : vector<16x24xf32>, vector<24x8xf32>, vector<16x8xf32> -> vector<16x8xf32>
    %107 = vector.broadcast %10 : vector<1x8xf32> to vector<16x8xf32>
    %108 = arith.addf %106, %107 : vector<16x8xf32>
    %c0_48 = arith.constant 0 : index
    %c0_49 = arith.constant 0 : index
    %109 = vector.load %arg8[%c0_48, %c0_49] : memref<16x8xf32, #tpu.memory_space<vmem>>, vector<16x8xf32>
    tpu.vector_store %arg8[%c0_48, %c0_49], %108 {strides = array<i32>} : memref<16x8xf32, #tpu.memory_space<vmem>>, vector<16x8xf32>,
    return
  }
}

</mosaic_0001>

<llo_original>
// kernel: tpu_custom_call.1
$region0: #{tpu_custom_call.1}
  #allocation0 [shape = 'u32[]', space=smem, size = 0x4, offset = 0x4, fixed_abs, tag = 'smem constant byte address 0x4 - core index']
  #allocation1 [shape = 'u32[144,128]{1,0:T(1,128)}', space=vmem, size = 0x12000, scoped, tag = 'internal scratch']
  %s0 = inlined_call_operand.vmem [shape: f32[16,16], index: 0, kind: input, shape index: {}]
  %s1 = inlined_call_operand.vmem [shape: f32[16,8], index: 1, kind: input, shape index: {}]
  %s2 = inlined_call_operand.vmem [shape: f32[8,16], index: 2, kind: input, shape index: {}]
  %s3 = inlined_call_operand.vmem [shape: f32[16,8], index: 3, kind: input, shape index: {}]
  %s4 = inlined_call_operand.vmem [shape: f32[16,1], index: 4, kind: input, shape index: {}]
  %s5 = inlined_call_operand.vmem [shape: f32[16,8], index: 5, kind: input, shape index: {}]
  %s6 = inlined_call_operand.vmem [shape: f32[24,8], index: 6, kind: input, shape index: {}]
  %s7 = inlined_call_operand.vmem [shape: f32[11,16], index: 7, kind: input, shape index: {}]
  %s8 = inlined_call_operand.vmem [shape: f32[16,8], index: 8, kind: output, shape index: {}]
  %s9 = sld [smem:[#allocation0]]
  $region42: #{tpu_custom_call.1} parent=0
    _
  %s11 = ssub.s32 1, %s9
  %s12 = scalar_select 0, %s11, %s9
  // Predicated region
  $region2: #{tpu_custom_call.1} parent=0 // pred_check
    _
  $region3: #{tpu_custom_call.1} parent=0 // pred_check_branch
    %14 = sbr.rel (0) target = $region5
  $region4: #{tpu_custom_call.1} parent=0 // pred_region
    _
  $region5: #{tpu_custom_call.1} parent=0 // pred_fallthru
    _
  // Predicated region
  $region6: #{tpu_custom_call.1} parent=0 // pred_check
    _
  $region7: #{tpu_custom_call.1} parent=0 // pred_check_branch
    %16 = sbr.rel (0) target = $region9
  $region8: #{tpu_custom_call.1} parent=0 // pred_region
    _
  $region9: #{tpu_custom_call.1} parent=0 // pred_fallthru
    _
  // Predicated region
  $region10: #{tpu_custom_call.1} parent=0 // pred_check
    _
  $region11: #{tpu_custom_call.1} parent=0 // pred_check_branch
    %18 = sbr.rel (0) target = $region13
  $region12: #{tpu_custom_call.1} parent=0 // pred_region
    _
  $region13: #{tpu_custom_call.1} parent=0 // pred_fallthru
    _
  // Predicated region
  $region14: #{tpu_custom_call.1} parent=0 // pred_check
    _
  $region15: #{tpu_custom_call.1} parent=0 // pred_check_branch
    %20 = sbr.rel (0) target = $region17
  $region16: #{tpu_custom_call.1} parent=0 // pred_region
    _
  $region17: #{tpu_custom_call.1} parent=0 // pred_fallthru
    _
  // Predicated region
  $region18: #{tpu_custom_call.1} parent=0 // pred_check
    _
  $region19: #{tpu_custom_call.1} parent=0 // pred_check_branch
    %22 = sbr.rel (0) target = $region21
  $region20: #{tpu_custom_call.1} parent=0 // pred_region
    _
  $region21: #{tpu_custom_call.1} parent=0 // pred_fallthru
    _
  // Predicated region
  $region22: #{tpu_custom_call.1} parent=0 // pred_check
    _
  $region23: #{tpu_custom_call.1} parent=0 // pred_check_branch
    %24 = sbr.rel (0) target = $region25
  $region24: #{tpu_custom_call.1} parent=0 // pred_region
    _
  $region25: #{tpu_custom_call.1} parent=0 // pred_fallthru
    _
  // Predicated region
  $region26: #{tpu_custom_call.1} parent=0 // pred_check
    _
  $region27: #{tpu_custom_call.1} parent=0 // pred_check_branch
    %26 = sbr.rel (0) target = $region29
  $region28: #{tpu_custom_call.1} parent=0 // pred_region
    _
  $region29: #{tpu_custom_call.1} parent=0 // pred_fallthru
    _
  // Predicated region
  $region30: #{tpu_custom_call.1} parent=0 // pred_check
    _
  $region31: #{tpu_custom_call.1} parent=0 // pred_check_branch
    %28 = sbr.rel (0) target = $region33
  $region32: #{tpu_custom_call.1} parent=0 // pred_region
    _
  $region33: #{tpu_custom_call.1} parent=0 // pred_fallthru
    _
  %v29 = vld [vmem:[%s7] sm:$0x1]
  %v30 = vld [vmem:[%s7 + $0x1] sm:$0x1]
  %v31 = vld [vmem:[%s7 + $0x2] sm:$0x1]
  %v32 = vld [vmem:[%s7 + $0x3] sm:$0x1]
  %v33 = vld [vmem:[%s7 + $0x4] sm:$0x1]
  %v34 = vld [vmem:[%s7 + $0x5] sm:$0x1]
  %v35 = vld [vmem:[%s7 + $0x6] sm:$0x1]
  %v36 = vld [vmem:[%s7 + $0x7] sm:$0x1]
  %v37 = vld [vmem:[%s7 + $0x8] sm:$0x1]
  %v38 = vld [vmem:[%s7 + $0x9] sm:$0x1]
  %v39 = vld [vmem:[%s7 + $0xa] sm:$0x1]
  %v40 = vld [vmem:[%s0] sm:$0xff]
  %v41 = vld [vmem:[%s0 + $0x8] sm:$0xff]
  %v42 = vld [vmem:[%s1] sm:$0xff]
  %v43 = vld [vmem:[%s1 + $0x8] sm:$0xff]
  %v44 = vld [vmem:[%s2] sm:$0xff]
  %vm45 = vcmask 64512
  %v47 = vsel %vm45, %v42, 0
  %v50 = vsel %vm45, %v43, 0
  %52 = vmatprep.subr.mxu0 0.0
  %53 = vmatpush1.msra.mxu0 %v44
  %54 = vmatprep.subr.mxu0 0.0
  %55 = vmatpush1.msra.mxu0 0.0
  %56 = vmatprep.subr.mxu0 0.0
  %57 = vmatpush1.msra.mxu0 0.0
  %58 = vmatprep.subr.mxu0 0.0
  %59 = vmatpush1.msra.mxu0 0.0
  %60 = vmatprep.subr.mxu0 0.0
  %61 = vmatpush1.msra.mxu0 0.0
  %62 = vmatprep.subr.mxu0 0.0
  %63 = vmatpush1.msra.mxu0 0.0
  %64 = vmatprep.subr.mxu0 0.0
  %65 = vmatpush1.msra.mxu0 0.0
  %66 = vmatprep.subr.mxu0 0.0
  %67 = vmatpush1.msra.mxu0 0.0
  %68 = vmatprep.subr.mxu0 0.0
  %69 = vmatpush1.msra.mxu0 0.0
  %70 = vmatprep.subr.mxu0 0.0
  %71 = vmatpush1.msra.mxu0 0.0
  %72 = vmatprep.subr.mxu0 0.0
  %73 = vmatpush1.msra.mxu0 0.0
  %74 = vmatprep.subr.mxu0 0.0
  %75 = vmatpush1.msra.mxu0 0.0
  %76 = vmatprep.subr.mxu0 0.0
  %77 = vmatpush1.msra.mxu0 0.0
  %78 = vmatprep.subr.mxu0 0.0
  %79 = vmatpush1.msra.mxu0 0.0
  %80 = vmatprep.subr.mxu0 0.0
  %81 = vmatpush1.msra.mxu0 0.0
  %82 = vmatprep.subr.mxu0 0.0
  %83 = vmatpush1.msra.mxu0 0.0
  %84 = vmatprep.subr.mxu0 0.0
  %85 = vmatpush1.msra.mxu0 0.0
  %86 = vmatprep.subr.mxu0 0.0
  %87 = vmatpush1.msra.mxu0 0.0
  %88 = vmatprep.subr.mxu0 0.0
  %89 = vmatpush1.msra.mxu0 0.0
  %90 = vmatprep.subr.mxu0 0.0
  %91 = vmatpush1.msra.mxu0 0.0
  %92 = vmatprep.subr.mxu0 0.0
  %93 = vmatpush1.msra.mxu0 0.0
  %94 = vmatprep.subr.mxu0 0.0
  %95 = vmatpush1.msra.mxu0 0.0
  %96 = vmatprep.subr.mxu0 0.0
  %97 = vmatpush1.msra.mxu0 0.0
  %98 = vmatprep.subr.mxu0 0.0
  %99 = vmatpush1.msra.mxu0 0.0
  %100 = vmatprep.subr.mxu0 0.0
  %101 = vmatpush1.msra.mxu0 0.0
  %102 = vmatprep.subr.mxu0 0.0
  %103 = vmatpush1.msra.mxu0 0.0
  %104 = vmatprep.subr.mxu0 0.0
  %105 = vmatpush1.msra.mxu0 0.0
  %106 = vmatprep.subr.mxu0 0.0
  %107 = vmatpush1.msra.mxu0 0.0
  %108 = vmatprep.subr.mxu0 0.0
  %109 = vmatpush1.msra.mxu0 0.0
  %110 = vmatprep.subr.mxu0 0.0
  %111 = vmatpush1.msra.mxu0 0.0
  %112 = vmatprep.subr.mxu0 0.0
  %113 = vmatpush1.msra.mxu0 0.0
  %114 = vmatprep.subr.mxu0 0.0
  %115 = vmatpush1.msra.mxu0 0.0
  %116 = vmatprep.mubr.f32.mxu0 0.0
  %117 = vmatmul.mubr.f32.gmra.mrb[0].mxu0 %v47
  %v118 = vpop.f32.mrb[0].mxu0
  %v119 = vadd.f32 0.0, %v118
  %v120 = vpop.f32.mrb[0].mxu0
  %121 = vmatprep.mubr.f32.mxu0 0.0
  %122 = vmatmul.mubr.f32.gmra.mrb[0].mxu0 %v50
  %v123 = vpop.f32.mrb[0].mxu0
  %v124 = vadd.f32 0.0, %v123
  %v125 = vpop.f32.mrb[0].mxu0
  %126 = vdwg.mxu0
  %v127 = vlaneseq
  %v128 = vshrl.u32 %v127, 7
  %v129 = vsub.s32 0, %v128
  %v130 = vrot.slane %v29, %v129
  %vm131 = vcmask 130048
  %v133 = vsel %vm131, %v40, 0
  %v136 = vsel %vm131, %v41, 0
  %138 = vmatprep.subr.mxu0 0.0
  %139 = vmatpush1.msra.mxu0 %v119
  %140 = vmatprep.subr.mxu0 0.0
  %141 = vmatpush1.msra.mxu0 %v124
  %142 = vmatprep.subr.mxu0 0.0
  %143 = vmatpush1.msra.mxu0 0.0
  %144 = vmatprep.subr.mxu0 0.0
  %145 = vmatpush1.msra.mxu0 0.0
  %146 = vmatprep.subr.mxu0 0.0
  %147 = vmatpush1.msra.mxu0 0.0
  %148 = vmatprep.subr.mxu0 0.0
  %149 = vmatpush1.msra.mxu0 0.0
  %150 = vmatprep.subr.mxu0 0.0
  %151 = vmatpush1.msra.mxu0 0.0
  %152 = vmatprep.subr.mxu0 0.0
  %153 = vmatpush1.msra.mxu0 0.0
  %154 = vmatprep.subr.mxu0 0.0
  %155 = vmatpush1.msra.mxu0 0.0
  %156 = vmatprep.subr.mxu0 0.0
  %157 = vmatpush1.msra.mxu0 0.0
  %158 = vmatprep.subr.mxu0 0.0
  %159 = vmatpush1.msra.mxu0 0.0
  %160 = vmatprep.subr.mxu0 0.0
  %161 = vmatpush1.msra.mxu0 0.0
  %162 = vmatprep.subr.mxu0 0.0
  %163 = vmatpush1.msra.mxu0 0.0
  %164 = vmatprep.subr.mxu0 0.0
  %165 = vmatpush1.msra.mxu0 0.0
  %166 = vmatprep.subr.mxu0 0.0
  %167 = vmatpush1.msra.mxu0 0.0
  %168 = vmatprep.subr.mxu0 0.0
  %169 = vmatpush1.msra.mxu0 0.0
  %170 = vmatprep.subr.mxu0 0.0
  %171 = vmatpush1.msra.mxu0 0.0
  %172 = vmatprep.subr.mxu0 0.0
  %173 = vmatpush1.msra.mxu0 0.0
  %174 = vmatprep.subr.mxu0 0.0
  %175 = vmatpush1.msra.mxu0 0.0
  %176 = vmatprep.subr.mxu0 0.0
  %177 = vmatpush1.msra.mxu0 0.0
  %178 = vmatprep.subr.mxu0 0.0
  %179 = vmatpush1.msra.mxu0 0.0
  %180 = vmatprep.subr.mxu0 0.0
  %181 = vmatpush1.msra.mxu0 0.0
  %182 = vmatprep.subr.mxu0 0.0
  %183 = vmatpush1.msra.mxu0 0.0
  %184 = vmatprep.subr.mxu0 0.0
  %185 = vmatpush1.msra.mxu0 0.0
  %186 = vmatprep.subr.mxu0 0.0
  %187 = vmatpush1.msra.mxu0 0.0
  %188 = vmatprep.subr.mxu0 0.0
  %189 = vmatpush1.msra.mxu0 0.0
  %190 = vmatprep.subr.mxu0 0.0
  %191 = vmatpush1.msra.mxu0 0.0
  %192 = vmatprep.subr.mxu0 0.0
  %193 = vmatpush1.msra.mxu0 0.0
  %194 = vmatprep.subr.mxu0 0.0
  %195 = vmatpush1.msra.mxu0 0.0
  %196 = vmatprep.subr.mxu0 0.0
  %197 = vmatpush1.msra.mxu0 0.0
  %198 = vmatprep.subr.mxu0 0.0
  %199 = vmatpush1.msra.mxu0 0.0
  %200 = vmatprep.subr.mxu0 0.0
  %201 = vmatpush1.msra.mxu0 0.0
  %202 = vmatprep.mubr.f32.mxu0 0.0
  %203 = vmatmul.mubr.f32.gmra.mrb[0].mxu0 %v133
  %v204 = vpop.f32.mrb[0].mxu0
  %v205 = vadd.f32 %v130, %v204
  %v206 = vpop.f32.mrb[0].mxu0
  %207 = vmatprep.mubr.f32.mxu0 0.0
  %208 = vmatmul.mubr.f32.gmra.mrb[0].mxu0 %v136
  %v209 = vpop.f32.mrb[0].mxu0
  %v210 = vadd.f32 %v130, %v209
  %v211 = vpop.f32.mrb[0].mxu0
  %212 = vdwg.mxu0
  %v213 = vmax.f32 %v205, 0.0
  %v214 = vmax.f32 %v210, 0.0
  %v215 = vld [vmem:[%s3] sm:$0xff]
  %v216 = vld [vmem:[%s3 + $0x8] sm:$0xff]
  %v218 = vsel %vm131, %v213, 0
  %v221 = vsel %vm131, %v214, 0
  %223 = vmatprep.subr.mxu0 0.0
  %224 = vmatpush1.msra.mxu0 %v215
  %225 = vmatprep.subr.mxu0 0.0
  %226 = vmatpush1.msra.mxu0 %v216
  %227 = vmatprep.subr.mxu0 0.0
  %228 = vmatpush1.msra.mxu0 0.0
  %229 = vmatprep.subr.mxu0 0.0
  %230 = vmatpush1.msra.mxu0 0.0
  %231 = vmatprep.subr.mxu0 0.0
  %232 = vmatpush1.msra.mxu0 0.0
  %233 = vmatprep.subr.mxu0 0.0
  %234 = vmatpush1.msra.mxu0 0.0
  %235 = vmatprep.subr.mxu0 0.0
  %236 = vmatpush1.msra.mxu0 0.0
  %237 = vmatprep.subr.mxu0 0.0
  %238 = vmatpush1.msra.mxu0 0.0
  %239 = vmatprep.subr.mxu0 0.0
  %240 = vmatpush1.msra.mxu0 0.0
  %241 = vmatprep.subr.mxu0 0.0
  %242 = vmatpush1.msra.mxu0 0.0
  %243 = vmatprep.subr.mxu0 0.0
  %244 = vmatpush1.msra.mxu0 0.0
  %245 = vmatprep.subr.mxu0 0.0
  %246 = vmatpush1.msra.mxu0 0.0
  %247 = vmatprep.subr.mxu0 0.0
  %248 = vmatpush1.msra.mxu0 0.0
  %249 = vmatprep.subr.mxu0 0.0
  %250 = vmatpush1.msra.mxu0 0.0
  %251 = vmatprep.subr.mxu0 0.0
  %252 = vmatpush1.msra.mxu0 0.0
  %253 = vmatprep.subr.mxu0 0.0
  %254 = vmatpush1.msra.mxu0 0.0
  %255 = vmatprep.subr.mxu0 0.0
  %256 = vmatpush1.msra.mxu0 0.0
  %257 = vmatprep.subr.mxu0 0.0
  %258 = vmatpush1.msra.mxu0 0.0
  %259 = vmatprep.subr.mxu0 0.0
  %260 = vmatpush1.msra.mxu0 0.0
  %261 = vmatprep.subr.mxu0 0.0
  %262 = vmatpush1.msra.mxu0 0.0
  %263 = vmatprep.subr.mxu0 0.0
  %264 = vmatpush1.msra.mxu0 0.0
  %265 = vmatprep.subr.mxu0 0.0
  %266 = vmatpush1.msra.mxu0 0.0
  %267 = vmatprep.subr.mxu0 0.0
  %268 = vmatpush1.msra.mxu0 0.0
  %269 = vmatprep.subr.mxu0 0.0
  %270 = vmatpush1.msra.mxu0 0.0
  %271 = vmatprep.subr.mxu0 0.0
  %272 = vmatpush1.msra.mxu0 0.0
  %273 = vmatprep.subr.mxu0 0.0
  %274 = vmatpush1.msra.mxu0 0.0
  %275 = vmatprep.subr.mxu0 0.0
  %276 = vmatpush1.msra.mxu0 0.0
  %277 = vmatprep.subr.mxu0 0.0
  %278 = vmatpush1.msra.mxu0 0.0
  %279 = vmatprep.subr.mxu0 0.0
  %280 = vmatpush1.msra.mxu0 0.0
  %281 = vmatprep.subr.mxu0 0.0
  %282 = vmatpush1.msra.mxu0 0.0
  %283 = vmatprep.subr.mxu0 0.0
  %284 = vmatpush1.msra.mxu0 0.0
  %285 = vmatprep.subr.mxu0 0.0
  %286 = vmatpush1.msra.mxu0 0.0
  %287 = vmatprep.mubr.f32.mxu0 0.0
  %288 = vmatmul.mubr.f32.gmra.mrb[0].mxu0 %v218
  %v289 = vpop.f32.mrb[0].mxu0
  %v290 = vadd.f32 0.0, %v289
  %v291 = vpop.f32.mrb[0].mxu0
  %292 = vmatprep.mubr.f32.mxu0 0.0
  %293 = vmatmul.mubr.f32.gmra.mrb[0].mxu0 %v221
  %v294 = vpop.f32.mrb[0].mxu0
  %v295 = vadd.f32 0.0, %v294
  %v296 = vpop.f32.mrb[0].mxu0
  %297 = vdwg.mxu0
  %v298 = vlaneseq
  %v299 = vshrl.u32 %v298, 7
  %v300 = vsub.s32 0, %v299
  %v301 = vrot.slane %v30, %v300
  %302 = vmatprep.subr.mxu0 0.0
  %303 = vmatpush1.msra.mxu0 %v290
  %304 = vmatprep.subr.mxu0 0.0
  %305 = vmatpush1.msra.mxu0 %v295
  %306 = vmatprep.subr.mxu0 0.0
  %307 = vmatpush1.msra.mxu0 0.0
  %308 = vmatprep.subr.mxu0 0.0
  %309 = vmatpush1.msra.mxu0 0.0
  %310 = vmatprep.subr.mxu0 0.0
  %311 = vmatpush1.msra.mxu0 0.0
  %312 = vmatprep.subr.mxu0 0.0
  %313 = vmatpush1.msra.mxu0 0.0
  %314 = vmatprep.subr.mxu0 0.0
  %315 = vmatpush1.msra.mxu0 0.0
  %316 = vmatprep.subr.mxu0 0.0
  %317 = vmatpush1.msra.mxu0 0.0
  %318 = vmatprep.subr.mxu0 0.0
  %319 = vmatpush1.msra.mxu0 0.0
  %320 = vmatprep.subr.mxu0 0.0
  %321 = vmatpush1.msra.mxu0 0.0
  %322 = vmatprep.subr.mxu0 0.0
  %323 = vmatpush1.msra.mxu0 0.0
  %324 = vmatprep.subr.mxu0 0.0
  %325 = vmatpush1.msra.mxu0 0.0
  %326 = vmatprep.subr.mxu0 0.0
  %327 = vmatpush1.msra.mxu0 0.0
  %328 = vmatprep.subr.mxu0 0.0
  %329 = vmatpush1.msra.mxu0 0.0
  %330 = vmatprep.subr.mxu0 0.0
  %331 = vmatpush1.msra.mxu0 0.0
  %332 = vmatprep.subr.mxu0 0.0
  %333 = vmatpush1.msra.mxu0 0.0
  %334 = vmatprep.subr.mxu0 0.0
  %335 = vmatpush1.msra.mxu0 0.0
  %336 = vmatprep.subr.mxu0 0.0
  %337 = vmatpush1.msra.mxu0 0.0
  %338 = vmatprep.subr.mxu0 0.0
  %339 = vmatpush1.msra.mxu0 0.0
  %340 = vmatprep.subr.mxu0 0.0
  %341 = vmatpush1.msra.mxu0 0.0
  %342 = vmatprep.subr.mxu0 0.0
  %343 = vmatpush1.msra.mxu0 0.0
  %344 = vmatprep.subr.mxu0 0.0
  %345 = vmatpush1.msra.mxu0 0.0
  %346 = vmatprep.subr.mxu0 0.0
  %347 = vmatpush1.msra.mxu0 0.0
  %348 = vmatprep.subr.mxu0 0.0
  %349 = vmatpush1.msra.mxu0 0.0
  %350 = vmatprep.subr.mxu0 0.0
  %351 = vmatpush1.msra.mxu0 0.0
  %352 = vmatprep.subr.mxu0 0.0
  %353 = vmatpush1.msra.mxu0 0.0
  %354 = vmatprep.subr.mxu0 0.0
  %355 = vmatpush1.msra.mxu0 0.0
  %356 = vmatprep.subr.mxu0 0.0
  %357 = vmatpush1.msra.mxu0 0.0
  %358 = vmatprep.subr.mxu0 0.0
  %359 = vmatpush1.msra.mxu0 0.0
  %360 = vmatprep.subr.mxu0 0.0
  %361 = vmatpush1.msra.mxu0 0.0
  %362 = vmatprep.subr.mxu0 0.0
  %363 = vmatpush1.msra.mxu0 0.0
  %364 = vmatprep.subr.mxu0 0.0
  %365 = vmatpush1.msra.mxu0 0.0
  %366 = vmatprep.mubr.f32.mxu0 0.0
  %367 = vmatmul.mubr.f32.gmra.mrb[0].mxu0 %v133
  %v368 = vpop.f32.mrb[0].mxu0
  %v369 = vadd.f32 %v301, %v368
  %v370 = vpop.f32.mrb[0].mxu0
  %371 = vmatprep.mubr.f32.mxu0 0.0
  %372 = vmatmul.mubr.f32.gmra.mrb[0].mxu0 %v136
  %v373 = vpop.f32.mrb[0].mxu0
  %v374 = vadd.f32 %v301, %v373
  %v375 = vpop.f32.mrb[0].mxu0
  %376 = vdwg.mxu0
  %v377 = vsel %vm45, %v369, 0.0
  %v378 = vsel %vm45, %v374, 0.0
  %v379 = vadd.f32 %v377, %v378
  %v380 = vrot.slane %v379, 4
  %v381 = vadd.f32 %v379, %v380
  %v382 = vrot.slane %v381, 2
  %v383 = vadd.f32 %v381, %v382
  %v384 = vrot.slane %v383, 1
  %v385 = vadd.f32 %v383, %v384
  %v386 = vrcp.pop 16.0
  %v387 = vmul.f32 %v385, %v386
  %v388 = vmul.f32 %v369, %v369
  %v389 = vmul.f32 %v374, %v374
  %v390 = vsel %vm45, %v388, 0.0
  %v391 = vsel %vm45, %v389, 0.0
  %v392 = vadd.f32 %v390, %v391
  %v393 = vrot.slane %v392, 4
  %v394 = vadd.f32 %v392, %v393
  %v395 = vrot.slane %v394, 2
  %v396 = vadd.f32 %v394, %v395
  %v397 = vrot.slane %v396, 1
  %v398 = vadd.f32 %v396, %v397
  %v399 = vmul.f32 %v398, %v386
  %v400 = vmul.f32 %v387, %v387
  %v401 = vsub.f32 %v399, %v400
  %v402 = vsub.f32 %v369, %v387
  %v403 = vsub.f32 %v374, %v387
  %v404 = vadd.f32 %v401, 1e-05
  %v405 = vrsqrt.pop %v404
  %v406 = vmul.f32 %v402, %v405
  %v407 = vmul.f32 %v403, %v405
  %v408 = vlaneseq
  %v409 = vshrl.u32 %v408, 7
  %v410 = vsub.s32 0, %v409
  %v411 = vrot.slane %v31, %v410
  %v412 = vmul.f32 %v406, %v411
  %v413 = vmul.f32 %v407, %v411
  %v414 = vlaneseq
  %v415 = vshrl.u32 %v414, 7
  %v416 = vsub.s32 0, %v415
  %v417 = vrot.slane %v32, %v416
  %v418 = vadd.f32 %v412, %v417
  %v419 = vadd.f32 %v413, %v417
  %v420 = vmax.f32 %v418, 0.0
  %v421 = vmax.f32 %v419, 0.0
  %v422 = vld [vmem:[%s4] sm:$0xff]
  %v423 = vld [vmem:[%s4 + $0x8] sm:$0xff]
  %425 = vset.pattern.permute.xlu0 0
  %426 = vperm.xlu0 %425, %v422
  %v427 = vpop.permute.xlu0 %426
  %430 = vset.pattern.permute.xlu0 0
  %431 = vperm.xlu0 %430, %v423
  %v432 = vpop.permute.xlu0 %431
  %v434 = vlaneseq
  %v435 = vshrl.u32 %v434, 7
  %v436 = vsub.s32 0, %v435
  %v437 = vrot.slane %v33, %v436
  %v438 = vmul.f32 %v427, %v437
  %v439 = vmul.f32 %v432, %v437
  %v440 = vlaneseq
  %v441 = vshrl.u32 %v440, 7
  %v442 = vsub.s32 0, %v441
  %v443 = vrot.slane %v34, %v442
  %v444 = vadd.f32 %v438, %v443
  %v445 = vadd.f32 %v439, %v443
  %v446 = vsel %vm45, %v444, 0.0
  %v447 = vsel %vm45, %v445, 0.0
  %v448 = vadd.f32 %v446, %v447
  %v449 = vrot.slane %v448, 4
  %v450 = vadd.f32 %v448, %v449
  %v451 = vrot.slane %v450, 2
  %v452 = vadd.f32 %v450, %v451
  %v453 = vrot.slane %v452, 1
  %v454 = vadd.f32 %v452, %v453
  %v455 = vmul.f32 %v454, %v386
  %v456 = vmul.f32 %v444, %v444
  %v457 = vmul.f32 %v445, %v445
  %v458 = vsel %vm45, %v456, 0.0
  %v459 = vsel %vm45, %v457, 0.0
  %v460 = vadd.f32 %v458, %v459
  %v461 = vrot.slane %v460, 4
  %v462 = vadd.f32 %v460, %v461
  %v463 = vrot.slane %v462, 2
  %v464 = vadd.f32 %v462, %v463
  %v465 = vrot.slane %v464, 1
  %v466 = vadd.f32 %v464, %v465
  %v467 = vmul.f32 %v466, %v386
  %v468 = vmul.f32 %v455, %v455
  %v469 = vsub.f32 %v467, %v468
  %v470 = vsub.f32 %v444, %v455
  %v471 = vsub.f32 %v445, %v455
  %v472 = vadd.f32 %v469, 1e-05
  %v473 = vrsqrt.pop %v472
  %v474 = vmul.f32 %v470, %v473
  %v475 = vmul.f32 %v471, %v473
  %v476 = vlaneseq
  %v477 = vshrl.u32 %v476, 7
  %v478 = vsub.s32 0, %v477
  %v479 = vrot.slane %v35, %v478
  %v480 = vmul.f32 %v474, %v479
  %v481 = vmul.f32 %v475, %v479
  %v482 = vlaneseq
  %v483 = vshrl.u32 %v482, 7
  %v484 = vsub.s32 0, %v483
  %v485 = vrot.slane %v36, %v484
  %v486 = vadd.f32 %v480, %v485
  %v487 = vadd.f32 %v481, %v485
  %v488 = vmax.f32 %v486, 0.0
  %v489 = vmax.f32 %v487, 0.0
  %v490 = vld [vmem:[%s5] sm:$0xff]
  %v491 = vld [vmem:[%s5 + $0x8] sm:$0xff]
  %v492 = vsel %vm45, %v490, 0.0
  %v493 = vsel %vm45, %v491, 0.0
  %v494 = vadd.f32 %v492, %v493
  %v495 = vrot.slane %v494, 4
  %v496 = vadd.f32 %v494, %v495
  %v497 = vrot.slane %v496, 2
  %v498 = vadd.f32 %v496, %v497
  %v499 = vrot.slane %v498, 1
  %v500 = vadd.f32 %v498, %v499
  %v501 = vmul.f32 %v500, %v386
  %v502 = vmul.f32 %v490, %v490
  %v503 = vmul.f32 %v491, %v491
  %v504 = vsel %vm45, %v502, 0.0
  %v505 = vsel %vm45, %v503, 0.0
  %v506 = vadd.f32 %v504, %v505
  %v507 = vrot.slane %v506, 4
  %v508 = vadd.f32 %v506, %v507
  %v509 = vrot.slane %v508, 2
  %v510 = vadd.f32 %v508, %v509
  %v511 = vrot.slane %v510, 1
  %v512 = vadd.f32 %v510, %v511
  %v513 = vmul.f32 %v512, %v386
  %v514 = vmul.f32 %v501, %v501
  %v515 = vsub.f32 %v513, %v514
  %v516 = vsub.f32 %v490, %v501
  %v517 = vsub.f32 %v491, %v501
  %v518 = vadd.f32 %v515, 1e-05
  %v519 = vrsqrt.pop %v518
  %v520 = vmul.f32 %v516, %v519
  %v521 = vmul.f32 %v517, %v519
  %v522 = vlaneseq
  %v523 = vshrl.u32 %v522, 7
  %v524 = vsub.s32 0, %v523
  %v525 = vrot.slane %v37, %v524
  %v526 = vmul.f32 %v520, %v525
  %v527 = vmul.f32 %v521, %v525
  %v528 = vlaneseq
  %v529 = vshrl.u32 %v528, 7
  %v530 = vsub.s32 0, %v529
  %v531 = vrot.slane %v38, %v530
  %v532 = vadd.f32 %v526, %v531
  %v533 = vadd.f32 %v527, %v531
  %v534 = vmax.f32 %v532, 0.0
  %v535 = vmax.f32 %v533, 0.0
  %538 = vrot.lane.b32.xlu0 %v488, 8
  %v539 = vpop.permute.xlu0 %538
  %540 = vrot.lane.b32.xlu0 %v489, 8
  %v541 = vpop.permute.xlu0 %540
  %546 = vrot.lane.b32.xlu0 %v534, 16
  %v547 = vpop.permute.xlu0 %546
  %548 = vrot.lane.b32.xlu0 %v535, 16
  %v549 = vpop.permute.xlu0 %548
  %v552 = vsel %vm45, %v420, %v539
  %v553 = vsel %vm45, %v421, %v541
  %v554 = vsel %vm131, %v552, %v547
  %v555 = vsel %vm131, %v553, %v549
  %v556 = vld [vmem:[%s6] sm:$0xff]
  %v557 = vld [vmem:[%s6 + $0x8] sm:$0xff]
  %v558 = vld [vmem:[%s6 + $0x10] sm:$0xff]
  %v559 = vlaneseq
  %v560 = vshrl.u32 %v559, 7
  %v561 = vsub.s32 0, %v560
  %v562 = vrot.slane %v39, %v561
  %vm563 = vcmask 195584
  %v565 = vsel %vm563, %v554, 0
  %v568 = vsel %vm563, %v555, 0
  %570 = vmatprep.subr.mxu0 0.0
  %571 = vmatpush1.msra.mxu0 %v556
  %572 = vmatprep.subr.mxu0 0.0
  %573 = vmatpush1.msra.mxu0 %v557
  %574 = vmatprep.subr.mxu0 0.0
  %575 = vmatpush1.msra.mxu0 %v558
  %576 = vmatprep.subr.mxu0 0.0
  %577 = vmatpush1.msra.mxu0 0.0
  %578 = vmatprep.subr.mxu0 0.0
  %579 = vmatpush1.msra.mxu0 0.0
  %580 = vmatprep.subr.mxu0 0.0
  %581 = vmatpush1.msra.mxu0 0.0
  %582 = vmatprep.subr.mxu0 0.0
  %583 = vmatpush1.msra.mxu0 0.0
  %584 = vmatprep.subr.mxu0 0.0
  %585 = vmatpush1.msra.mxu0 0.0
  %586 = vmatprep.subr.mxu0 0.0
  %587 = vmatpush1.msra.mxu0 0.0
  %588 = vmatprep.subr.mxu0 0.0
  %589 = vmatpush1.msra.mxu0 0.0
  %590 = vmatprep.subr.mxu0 0.0
  %591 = vmatpush1.msra.mxu0 0.0
  %592 = vmatprep.subr.mxu0 0.0
  %593 = vmatpush1.msra.mxu0 0.0
  %594 = vmatprep.subr.mxu0 0.0
  %595 = vmatpush1.msra.mxu0 0.0
  %596 = vmatprep.subr.mxu0 0.0
  %597 = vmatpush1.msra.mxu0 0.0
  %598 = vmatprep.subr.mxu0 0.0
  %599 = vmatpush1.msra.mxu0 0.0
  %600 = vmatprep.subr.mxu0 0.0
  %601 = vmatpush1.msra.mxu0 0.0
  %602 = vmatprep.subr.mxu0 0.0
  %603 = vmatpush1.msra.mxu0 0.0
  %604 = vmatprep.subr.mxu0 0.0
  %605 = vmatpush1.msra.mxu0 0.0
  %606 = vmatprep.subr.mxu0 0.0
  %607 = vmatpush1.msra.mxu0 0.0
  %608 = vmatprep.subr.mxu0 0.0
  %609 = vmatpush1.msra.mxu0 0.0
  %610 = vmatprep.subr.mxu0 0.0
  %611 = vmatpush1.msra.mxu0 0.0
  %612 = vmatprep.subr.mxu0 0.0
  %613 = vmatpush1.msra.mxu0 0.0
  %614 = vmatprep.subr.mxu0 0.0
  %615 = vmatpush1.msra.mxu0 0.0
  %616 = vmatprep.subr.mxu0 0.0
  %617 = vmatpush1.msra.mxu0 0.0
  %618 = vmatprep.subr.mxu0 0.0
  %619 = vmatpush1.msra.mxu0 0.0
  %620 = vmatprep.subr.mxu0 0.0
  %621 = vmatpush1.msra.mxu0 0.0
  %622 = vmatprep.subr.mxu0 0.0
  %623 = vmatpush1.msra.mxu0 0.0
  %624 = vmatprep.subr.mxu0 0.0
  %625 = vmatpush1.msra.mxu0 0.0
  %626 = vmatprep.subr.mxu0 0.0
  %627 = vmatpush1.msra.mxu0 0.0
  %628 = vmatprep.subr.mxu0 0.0
  %629 = vmatpush1.msra.mxu0 0.0
  %630 = vmatprep.subr.mxu0 0.0
  %631 = vmatpush1.msra.mxu0 0.0
  %632 = vmatprep.subr.mxu0 0.0
  %633 = vmatpush1.msra.mxu0 0.0
  %634 = vmatprep.mubr.f32.mxu0 0.0
  %635 = vmatmul.mubr.f32.gmra.mrb[0].mxu0 %v565
  %v636 = vpop.f32.mrb[0].mxu0
  %v637 = vadd.f32 %v562, %v636
  %v638 = vpop.f32.mrb[0].mxu0
  %639 = vmatprep.mubr.f32.mxu0 0.0
  %640 = vmatmul.mubr.f32.gmra.mrb[0].mxu0 %v568
  %v641 = vpop.f32.mrb[0].mxu0
  %v642 = vadd.f32 %v562, %v641
  %v643 = vpop.f32.mrb[0].mxu0
  %644 = vdwg.mxu0
  %645 = vst.msk [vmem:[%s8] sm:$0xff] %vm45, %v637
  %646 = vst.msk [vmem:[%s8 + $0x8] sm:$0xff] %vm45, %v642
  // Predicated region
  $region34: #{tpu_custom_call.1} parent=0 // pred_check
    _
  $region35: #{tpu_custom_call.1} parent=0 // pred_check_branch
    %648 = sbr.rel (0) target = $region37
  $region36: #{tpu_custom_call.1} parent=0 // pred_region
    _
  $region37: #{tpu_custom_call.1} parent=0 // pred_fallthru
    _
  // Predicated region
  $region38: #{tpu_custom_call.1} parent=0 // pred_check
    _
  $region39: #{tpu_custom_call.1} parent=0 // pred_check_branch
    %650 = sbr.rel (0) target = $region41
  $region40: #{tpu_custom_call.1} parent=0 // pred_region
    _
  $region41: #{tpu_custom_call.1} parent=0 // pred_fallthru
    _

</llo_original>
